<compile_context>
chip_gen: v7x
topology: tpu7x:2x2x1
jax: 0.10.0
libtpu: 0.0.40
codegen_flags: <defaults>
</compile_context>

<pallas_src>
import functools

import jax
import jax.numpy as jnp
from jax.experimental import pallas as pl
from jax.experimental.pallas import tpu as pltpu


def _round_up(x: int, m: int) -> int:
    return (x + m - 1) // m * m


# ------------------------- phase 1: streaming global average pool -------------------------

def _pool_kernel(x_ref, pooled_ref, *, inv_hw):
    # x_ref:      (bn, C_pad, t_hw)  input tile (zero-padded outside the true HW)
    # pooled_ref: (bn, C_pad, 1)     f32 accumulator, resident across the HW grid axis
    k = pl.program_id(1)

    @pl.when(k == 0)
    def _init():
        pooled_ref[...] = jnp.zeros_like(pooled_ref)

    # Read the tile only for the reduction; consumed immediately (no long-lived f32 copy).
    x = x_ref[...].astype(jnp.float32)
    pooled_ref[...] += jnp.sum(x, axis=-1, keepdims=True)

    @pl.when(k == pl.num_programs(1) - 1)
    def _finalize():
        # Divide by the true (unpadded) H*W; zero padding contributes nothing to the sum.
        pooled_ref[...] = pooled_ref[...] * inv_hw


# ------------------------- phase 2: batched squeeze-excite MLP -------------------------

def _se_mlp_kernel(pooled_ref, w1t_ref, w2t_ref, scale_ref):
    # pooled_ref: (N_pad, C_pad) f32
    # w1t_ref:    (C_pad, Cr)    f32  (= w1.T, zero-padded rows for padded channels)
    # w2t_ref:    (Cr, C_pad)    f32  (= w2.T, zero-padded cols for padded channels)
    # scale_ref:  (N_pad, C_pad) x.dtype
    p = pooled_ref[...]
    h = jnp.dot(p, w1t_ref[...], preferred_element_type=jnp.float32)
    h = jnp.maximum(h, 0.0)
    s = jnp.dot(h, w2t_ref[...], preferred_element_type=jnp.float32)
    scale_ref[...] = jax.nn.sigmoid(s).astype(scale_ref.dtype)


# ------------------------- phase 3: streaming channel gating -------------------------

def _gate_kernel(x_ref, scale_ref, o_ref):
    # x_ref:     (bn, C_pad, t_hw)   input dtype
    # scale_ref: (bn, C_pad, 1)      input dtype (cast once in phase 2)
    # o_ref:     (bn, C_pad, t_hw)
    o_ref[...] = x_ref[...] * scale_ref[...]


# ----------------------------------- wrapper -----------------------------------

def ca_layer(x_nchw, w1, w2, *, target_block_bytes=2 * 1024 * 1024):
    """x_nchw: (N, C, H, W); w1: (C//r, C); w2: (C, C//r). Returns (N, C, H, W)."""
    N, C, H, W = x_nchw.shape
    Cr = w1.shape[0]
    HW = H * W
    dtype = x_nchw.dtype
    itemsize = jnp.dtype(dtype).itemsize

    # Layout: channels on sublanes, flattened spatial on lanes (lane-dense stores).
    c_mult = 8 if itemsize >= 4 else (16 if itemsize == 2 else 32)
    C_pad = _round_up(C, c_mult)

    # Spatial tile: biggest multiple of 128 lanes that keeps one block <= target.
    max_hw = max(128, (target_block_bytes // (C_pad * itemsize)) // 128 * 128)
    t_hw = min(_round_up(HW, 128), max_hw)
    HW_pad = _round_up(HW, t_hw)     # t_hw is a multiple of 128, so HW_pad is too
    k_hw = HW_pad // t_hw

    # Pack batch elements per block when an entire (padded) sample is small.
    if k_hw == 1:
        bn = max(1, min(N, target_block_bytes // (C_pad * HW_pad * itemsize)))
    else:
        bn = 1
    N_pad = _round_up(N, bn)
    g_n = N_pad // bn

    # Zero-pad: zeros are neutral for the pooled sum and padded outputs are sliced away.
    x3 = x_nchw.reshape(N, C, HW)
    x3 = jnp.pad(x3, ((0, N_pad - N), (0, C_pad - C), (0, HW_pad - HW)))

    # Weights: pre-cast to f32, pre-transpose, zero-pad once in the wrapper
    # (they only feed the tiny one-shot MLP kernel).
    w1t = jnp.pad(w1.astype(jnp.float32).T, ((0, C_pad - C), (0, 0)))   # (C_pad, Cr)
    w2t = jnp.pad(w2.astype(jnp.float32).T, ((0, 0), (0, C_pad - C)))   # (Cr, C_pad)

    # --- phase 1: global average pool -> (N_pad, C_pad, 1) f32 ---
    pooled = pl.pallas_call(
        functools.partial(_pool_kernel, inv_hw=1.0 / HW),
        out_shape=jax.ShapeDtypeStruct((N_pad, C_pad, 1), jnp.float32),
        grid_spec=pltpu.PrefetchScalarGridSpec(
            num_scalar_prefetch=0,
            grid=(g_n, k_hw),                       # reduction (HW) axis last
            in_specs=[pl.BlockSpec((bn, C_pad, t_hw), lambda n, k: (n, 0, k))],
            out_specs=pl.BlockSpec((bn, C_pad, 1), lambda n, k: (n, 0, 0)),
        ),
        compiler_params=pltpu.CompilerParams(
            dimension_semantics=("parallel", "arbitrary")),
    )(x3)

    # --- phase 2: squeeze-excite MLP, batched over all samples (full arrays in VMEM) ---
    scale2d = pl.pallas_call(
        _se_mlp_kernel,
        out_shape=jax.ShapeDtypeStruct((N_pad, C_pad), dtype),
    )(pooled.reshape(N_pad, C_pad), w1t, w2t)
    scale = scale2d.reshape(N_pad, C_pad, 1)

    # --- phase 3: streaming gating out = x * scale (input dtype, lane-dense tiles) ---
    # Note: pipeline_mode=pl.Buffered(3) on the x spec can be swept on v6e if the
    # trace shows exposed DMA; default double-buffering keeps VMEM v7x-safe.
    out = pl.pallas_call(
        _gate_kernel,
        out_shape=jax.ShapeDtypeStruct((N_pad, C_pad, HW_pad), dtype),
        grid_spec=pltpu.PrefetchScalarGridSpec(
            num_scalar_prefetch=0,
            grid=(g_n, k_hw),
            in_specs=[
                pl.BlockSpec((bn, C_pad, t_hw), lambda n, k: (n, 0, k)),
                pl.BlockSpec((bn, C_pad, 1), lambda n, k: (n, 0, 0)),
            ],
            out_specs=pl.BlockSpec((bn, C_pad, t_hw), lambda n, k: (n, 0, k)),
        ),
        compiler_params=pltpu.CompilerParams(
            dimension_semantics=("parallel", "parallel")),
    )(x3, scale)

    return out[:N, :C, :HW].reshape(N, C, H, W)


def _reference(x, w1, w2):
    # Pure-JAX reference for sanity checking.
    pooled = jnp.mean(x, axis=(2, 3), keepdims=True)          # (N, C, 1, 1)
    h = jnp.einsum('rc,ncij->nrij', w1, pooled)
    h = jnp.maximum(h, 0.0)
    s = jnp.einsum('cr,nrij->ncij', w2, h)
    return x * jax.nn.sigmoid(s)


if __name__ == "__main__":
    key = jax.random.PRNGKey(0)
    N, C, H, W = 2, 32, 16, 16
    reduction = 16
    Cr = C // reduction

    kx, k1, k2 = jax.random.split(key, 3)
    x = jax.random.normal(kx, (N, C, H, W), dtype=jnp.float32)
    # Deterministic synthetic weights (bias=False in the module).
    w1 = jax.random.normal(k1, (Cr, C), dtype=jnp.float32) * 0.1
    w2 = jax.random.normal(k2, (C, Cr), dtype=jnp.float32) * 0.1

    out = ca_layer(x, w1, w2)
    jax.block_until_ready(out)

    ref = _reference(x, w1, w2)
    assert out.shape == (N, C, H, W)
    # NOTE: if inputs are bf16, loosen this tolerance (gating runs in the input dtype).
    assert jnp.allclose(out, ref, atol=1e-5, rtol=1e-5), float(jnp.max(jnp.abs(out - ref)))
    print("KERNEL_OK")
</pallas_src>

<mosaic_0001>
module attributes {stable_mosaic.version = 11 : i64} {
  func.func @_pool_kernel(%arg0: i32, %arg1: i32, %arg2: memref<2x32x256xf32, #tpu.memory_space<vmem>>, %arg3: memref<2x32x1xf32, #tpu.memory_space<vmem>>) attributes {dimension_semantics = [#tpu.dimension_semantics<parallel>, #tpu.dimension_semantics<arbitrary>], iteration_bounds = array<i64: 1, 1>, scalar_prefetch = 0 : i64, scratch_operands = 0 : i64, tpu.core_type = #tpu.core_type<tc>, window_params = [{transform_indices = @transform_0, window_bounds = array<i64: 2, 32, 256>}, {transform_indices = @transform_1, window_bounds = array<i64: 2, 32, 1>}]} {
    %c0_i32 = arith.constant 0 : i32
    %0 = arith.cmpi eq, %arg1, %c0_i32 : i32
    %1 = arith.extui %0 : i1 to i32
    %c0_i32_0 = arith.constant 0 : i32
    %2 = arith.cmpi ne, %1, %c0_i32_0 : i32
    scf.if %2 {
      %cst_11 = arith.constant 0.000000e+00 : f32
      %12 = vector.broadcast %cst_11 : f32 to vector<2x32x1xf32>
      %c0_12 = arith.constant 0 : index
      %c0_13 = arith.constant 0 : index
      %c0_14 = arith.constant 0 : index
      %13 = vector.load %arg3[%c0_12, %c0_13, %c0_14] : memref<2x32x1xf32, #tpu.memory_space<vmem>>, vector<2x32x1xf32>
      tpu.vector_store %arg3[%c0_12, %c0_13, %c0_14], %12 {strides = array<i32>} : memref<2x32x1xf32, #tpu.memory_space<vmem>>, vector<2x32x1xf32>,
    } else {
    }
    %c0 = arith.constant 0 : index
    %c0_1 = arith.constant 0 : index
    %c0_2 = arith.constant 0 : index
    %3 = vector.load %arg2[%c0, %c0_1, %c0_2] : memref<2x32x256xf32, #tpu.memory_space<vmem>>, vector<2x32x256xf32>
    %c0_3 = arith.constant 0 : index
    %c0_4 = arith.constant 0 : index
    %c0_5 = arith.constant 0 : index
    %4 = vector.load %arg3[%c0_3, %c0_4, %c0_5] : memref<2x32x1xf32, #tpu.memory_space<vmem>>, vector<2x32x1xf32>
    %cst = arith.constant dense<0.000000e+00> : vector<2x32xf32>
    %5 = vector.multi_reduction <add>, %3, %cst [2] : vector<2x32x256xf32> to vector<2x32xf32>
    %6 = vector.shape_cast %5 : vector<2x32xf32> to vector<2x32x1xf32>
    %7 = arith.addf %4, %6 : vector<2x32x1xf32>
    %c0_6 = arith.constant 0 : index
    %c0_7 = arith.constant 0 : index
    %c0_8 = arith.constant 0 : index
    %8 = vector.load %arg3[%c0_6, %c0_7, %c0_8] : memref<2x32x1xf32, #tpu.memory_space<vmem>>, vector<2x32x1xf32>
    tpu.vector_store %arg3[%c0_6, %c0_7, %c0_8], %7 {strides = array<i32>} : memref<2x32x1xf32, #tpu.memory_space<vmem>>, vector<2x32x1xf32>,
    %c0_i32_9 = arith.constant 0 : i32
    %9 = arith.cmpi eq, %arg1, %c0_i32_9 : i32
    %10 = arith.extui %9 : i1 to i32
    %c0_i32_10 = arith.constant 0 : i32
    %11 = arith.cmpi ne, %10, %c0_i32_10 : i32
    scf.if %11 {
      %c0_11 = arith.constant 0 : index
      %c0_12 = arith.constant 0 : index
      %c0_13 = arith.constant 0 : index
      %12 = vector.load %arg3[%c0_11, %c0_12, %c0_13] : memref<2x32x1xf32, #tpu.memory_space<vmem>>, vector<2x32x1xf32>
      %cst_14 = arith.constant 3.906250e-03 : f32
      %13 = vector.broadcast %cst_14 : f32 to vector<2x32x1xf32>
      %14 = arith.mulf %12, %13 : vector<2x32x1xf32>
      %c0_15 = arith.constant 0 : index
      %c0_16 = arith.constant 0 : index
      %c0_17 = arith.constant 0 : index
      %15 = vector.load %arg3[%c0_15, %c0_16, %c0_17] : memref<2x32x1xf32, #tpu.memory_space<vmem>>, vector<2x32x1xf32>
      tpu.vector_store %arg3[%c0_15, %c0_16, %c0_17], %14 {strides = array<i32>} : memref<2x32x1xf32, #tpu.memory_space<vmem>>, vector<2x32x1xf32>,
    } else {
    }
    return
  }
  func.func @transform_0(%arg0: i32, %arg1: i32) -> (i32, i32, i32) {
    %c0_i32 = arith.constant 0 : i32
    %c0_i32_0 = arith.constant 0 : i32
    return %arg0, %c0_i32, %arg1 : i32, i32, i32
  }
  func.func @transform_1(%arg0: i32, %arg1: i32) -> (i32, i32, i32) {
    %c0_i32 = arith.constant 0 : i32
    %c0_i32_0 = arith.constant 0 : i32
    %c0_i32_1 = arith.constant 0 : i32
    return %arg0, %c0_i32, %c0_i32_0 : i32, i32, i32
  }
}

</mosaic_0001>

<llo_original>
// kernel: tpu_custom_call.1
$region0: #{tpu_custom_call.1}
  #allocation0 [shape = 'u32[]', space=smem, size = 0x4, offset = 0x4, fixed_abs, tag = 'smem constant byte address 0x4 - core index']
  #allocation1 [shape = 'u32[144,128]{1,0:T(1,128)}', space=vmem, size = 0x12000, scoped, tag = 'internal scratch']
  %s0 = inlined_call_operand.hbm [shape: f32[2,32,256], index: 0, kind: input, shape index: {}]
  %s1 = inlined_call_operand.vmem [shape: f32[2,32,1], index: 1, kind: output, shape index: {}]
  %s2 = sld [smem:[#allocation0]]
  $region26: #{tpu_custom_call.1} parent=0
    _
  %s4 = ssub.s32 1, %s2
  %s5 = scalar_select 0, %s4, %s2
  $region1: #{tpu_custom_call.1} parent=0
    #allocation2 [shape = 'u8[65536]{0}', space=vmem, size = 0x10000, scoped, tag = 'input window, operand 0, single buffered']
    #allocation3 [shape = 's32[1]{0}', space=sflag, size = 0x4, scoped, tag = 'scoped memory for tpu_custom_call.1']
    %6 = vsyncpa [#allocation3], 0
    // Predicated region
    $region2: #{tpu_custom_call.1} parent=1 // pred_check
      _
    $region3: #{tpu_custom_call.1} parent=1 // pred_check_branch
      %8 = sbr.rel (0) target = $region5
    $region4: #{tpu_custom_call.1} parent=1 // pred_region
      %s10 = ssub.s32 2048, 2048
      %11 = vsyncadd [#allocation3], %s10
      %s12 = sshll.u32 [#allocation2], 4
      %s13 = int_to_ptr.vmem [resolvable:$true] %s12
      %18 = dma.hbm_to_vmem [thread:$0]  %s0, 2048, %s13, [#allocation3], 256, 256, 16
    $region5: #{tpu_custom_call.1} parent=1 // pred_fallthru
      _
    // Predicated region
    $region6: #{tpu_custom_call.1} parent=1 // pred_check
      _
    $region7: #{tpu_custom_call.1} parent=1 // pred_check_branch
      %20 = sbr.rel (0) target = $region9
    $region8: #{tpu_custom_call.1} parent=1 // pred_region
      %21 = dma.done [#allocation3], 2048
    $region9: #{tpu_custom_call.1} parent=1 // pred_fallthru
      _
    %p22 = scmp.eq.s32.totalorder 0, 0
    // Predicated region
    $region10: #{tpu_custom_call.1} parent=1 // pred_check
      %p23 = pneg %p22
    $region11: #{tpu_custom_call.1} parent=1 // pred_check_branch
      %25 = sbr.rel (%p23) target = $region13
    $region12: #{tpu_custom_call.1} parent=1 // pred_region
      %vm26 = vcmask 7168
      %27 = vst.msk [vmem:[%s1] sm:$0xff] %vm26, 0.0
      %28 = vst.msk [vmem:[%s1 + $0x8] sm:$0xff] %vm26, 0.0
      %29 = vst.msk [vmem:[%s1 + $0x10] sm:$0xff] %vm26, 0.0
      %30 = vst.msk [vmem:[%s1 + $0x18] sm:$0xff] %vm26, 0.0
      %31 = vst.msk [vmem:[%s1 + $0x20] sm:$0xff] %vm26, 0.0
      %32 = vst.msk [vmem:[%s1 + $0x28] sm:$0xff] %vm26, 0.0
      %33 = vst.msk [vmem:[%s1 + $0x30] sm:$0xff] %vm26, 0.0
      %34 = vst.msk [vmem:[%s1 + $0x38] sm:$0xff] %vm26, 0.0
    $region13: #{tpu_custom_call.1} parent=1 // pred_fallthru
      _
    %v35 = vld [vmem:[#allocation2] sm:$0xff]
    %v36 = vld [vmem:[#allocation2 + $0x8] sm:$0xff]
    %v37 = vld [vmem:[#allocation2 + $0x10] sm:$0xff]
    %v38 = vld [vmem:[#allocation2 + $0x18] sm:$0xff]
    %v39 = vld [vmem:[#allocation2 + $0x20] sm:$0xff]
    %v40 = vld [vmem:[#allocation2 + $0x28] sm:$0xff]
    %v41 = vld [vmem:[#allocation2 + $0x30] sm:$0xff]
    %v42 = vld [vmem:[#allocation2 + $0x38] sm:$0xff]
    %v43 = vld [vmem:[#allocation2 + $0x40] sm:$0xff]
    %v44 = vld [vmem:[#allocation2 + $0x48] sm:$0xff]
    %v45 = vld [vmem:[#allocation2 + $0x50] sm:$0xff]
    %v46 = vld [vmem:[#allocation2 + $0x58] sm:$0xff]
    %v47 = vld [vmem:[#allocation2 + $0x60] sm:$0xff]
    %v48 = vld [vmem:[#allocation2 + $0x68] sm:$0xff]
    %v49 = vld [vmem:[#allocation2 + $0x70] sm:$0xff]
    %v50 = vld [vmem:[#allocation2 + $0x78] sm:$0xff]
    %v51 = vld [vmem:[%s1] sm:$0xff]
    %v52 = vld [vmem:[%s1 + $0x8] sm:$0xff]
    %v53 = vld [vmem:[%s1 + $0x10] sm:$0xff]
    %v54 = vld [vmem:[%s1 + $0x18] sm:$0xff]
    %v55 = vld [vmem:[%s1 + $0x20] sm:$0xff]
    %v56 = vld [vmem:[%s1 + $0x28] sm:$0xff]
    %v57 = vld [vmem:[%s1 + $0x30] sm:$0xff]
    %v58 = vld [vmem:[%s1 + $0x38] sm:$0xff]
    %v59 = vadd.f32 %v35, %v36
    %60 = vadd.xlane.f32.xlu0 %v59
    %v61 = vpop.xlane.xlu0 %60
    %v62 = vadd.f32 %v37, %v38
    %63 = vadd.xlane.f32.xlu0 %v62
    %v64 = vpop.xlane.xlu0 %63
    %v65 = vadd.f32 %v39, %v40
    %66 = vadd.xlane.f32.xlu0 %v65
    %v67 = vpop.xlane.xlu0 %66
    %v68 = vadd.f32 %v41, %v42
    %69 = vadd.xlane.f32.xlu0 %v68
    %v70 = vpop.xlane.xlu0 %69
    %v71 = vadd.f32 %v43, %v44
    %72 = vadd.xlane.f32.xlu0 %v71
    %v73 = vpop.xlane.xlu0 %72
    %v74 = vadd.f32 %v45, %v46
    %75 = vadd.xlane.f32.xlu0 %v74
    %v76 = vpop.xlane.xlu0 %75
    %v77 = vadd.f32 %v47, %v48
    %78 = vadd.xlane.f32.xlu0 %v77
    %v79 = vpop.xlane.xlu0 %78
    %v80 = vadd.f32 %v49, %v50
    %81 = vadd.xlane.f32.xlu0 %v80
    %v82 = vpop.xlane.xlu0 %81
    %v83 = vadd.f32 %v51, %v61
    %v84 = vadd.f32 %v52, %v64
    %v85 = vadd.f32 %v53, %v67
    %v86 = vadd.f32 %v54, %v70
    %v87 = vadd.f32 %v55, %v73
    %v88 = vadd.f32 %v56, %v76
    %v89 = vadd.f32 %v57, %v79
    %v90 = vadd.f32 %v58, %v82
    %vm91 = vcmask 7168
    %92 = vst.msk [vmem:[%s1] sm:$0xff] %vm91, %v83
    %93 = vst.msk [vmem:[%s1 + $0x8] sm:$0xff] %vm91, %v84
    %94 = vst.msk [vmem:[%s1 + $0x10] sm:$0xff] %vm91, %v85
    %95 = vst.msk [vmem:[%s1 + $0x18] sm:$0xff] %vm91, %v86
    %96 = vst.msk [vmem:[%s1 + $0x20] sm:$0xff] %vm91, %v87
    %97 = vst.msk [vmem:[%s1 + $0x28] sm:$0xff] %vm91, %v88
    %98 = vst.msk [vmem:[%s1 + $0x30] sm:$0xff] %vm91, %v89
    %99 = vst.msk [vmem:[%s1 + $0x38] sm:$0xff] %vm91, %v90
    // Predicated region
    $region14: #{tpu_custom_call.1} parent=1 // pred_check
      %p100 = pneg %p22
    $region15: #{tpu_custom_call.1} parent=1 // pred_check_branch
      %102 = sbr.rel (%p100) target = $region17
    $region16: #{tpu_custom_call.1} parent=1 // pred_region
      %v103 = vld [vmem:[%s1] sm:$0xff]
      %v104 = vld [vmem:[%s1 + $0x8] sm:$0xff]
      %v105 = vld [vmem:[%s1 + $0x10] sm:$0xff]
      %v106 = vld [vmem:[%s1 + $0x18] sm:$0xff]
      %v107 = vld [vmem:[%s1 + $0x20] sm:$0xff]
      %v108 = vld [vmem:[%s1 + $0x28] sm:$0xff]
      %v109 = vld [vmem:[%s1 + $0x30] sm:$0xff]
      %v110 = vld [vmem:[%s1 + $0x38] sm:$0xff]
      %v111 = vmul.f32 %v103, 0.00390625
      %v112 = vmul.f32 %v104, 0.00390625
      %v113 = vmul.f32 %v105, 0.00390625
      %v114 = vmul.f32 %v106, 0.00390625
      %v115 = vmul.f32 %v107, 0.00390625
      %v116 = vmul.f32 %v108, 0.00390625
      %v117 = vmul.f32 %v109, 0.00390625
      %v118 = vmul.f32 %v110, 0.00390625
      %119 = vst.msk [vmem:[%s1] sm:$0xff] %vm91, %v111
      %120 = vst.msk [vmem:[%s1 + $0x8] sm:$0xff] %vm91, %v112
      %121 = vst.msk [vmem:[%s1 + $0x10] sm:$0xff] %vm91, %v113
      %122 = vst.msk [vmem:[%s1 + $0x18] sm:$0xff] %vm91, %v114
      %123 = vst.msk [vmem:[%s1 + $0x20] sm:$0xff] %vm91, %v115
      %124 = vst.msk [vmem:[%s1 + $0x28] sm:$0xff] %vm91, %v116
      %125 = vst.msk [vmem:[%s1 + $0x30] sm:$0xff] %vm91, %v117
      %126 = vst.msk [vmem:[%s1 + $0x38] sm:$0xff] %vm91, %v118
    $region17: #{tpu_custom_call.1} parent=1 // pred_fallthru
      _
    // Predicated region
    $region18: #{tpu_custom_call.1} parent=1 // pred_check
      _
    $region19: #{tpu_custom_call.1} parent=1 // pred_check_branch
      %128 = sbr.rel (0) target = $region21
    $region20: #{tpu_custom_call.1} parent=1 // pred_region
      _
    $region21: #{tpu_custom_call.1} parent=1 // pred_fallthru
      _
    // Predicated region
    $region22: #{tpu_custom_call.1} parent=1 // pred_check
      _
    $region23: #{tpu_custom_call.1} parent=1 // pred_check_branch
      %130 = sbr.rel (0) target = $region25
    $region24: #{tpu_custom_call.1} parent=1 // pred_region
      _
    $region25: #{tpu_custom_call.1} parent=1 // pred_fallthru
      _
    %131 = vsyncpa [#allocation3], 1

</llo_original>
